<compile_context>
chip_gen: v7x
topology: tpu7x:2x2x1
jax: 0.10.0
libtpu: 0.0.40
codegen_flags: <defaults>
</compile_context>

<pallas_src>
import functools

import jax
import jax.numpy as jnp
from jax import lax
from jax.experimental import pallas as pl
from jax.experimental.pallas import tpu as pltpu


# --------------------------------------------------------------------------
# Kernels
# --------------------------------------------------------------------------
def _make_pass1_kernel(direction: str, TH: int, H: int, W: int):
    """Per-tile max of |grad|; writes the max broadcast into a (1,1,8,128) block."""

    if direction == "x":

        def kernel(x_ref, pmax_ref):
            t = pl.program_id(1)
            xv = x_ref[...].astype(jnp.float32)                          # (1, TH, W)
            row = lax.broadcasted_iota(jnp.int32, (1, TH, W), 1) + t * TH
            cur = jnp.where(row < H, xv, 0.0)                            # zero pad rows >= H
            m = jnp.max(jnp.abs(cur[:, :, 0:1]))                         # output col 0  ( = x )
            m = jnp.maximum(m, jnp.max(jnp.abs(cur[:, :, W - 1:W])))     # output col W  ( = -x )
            if W > 1:                                                    # interior columns
                m = jnp.maximum(
                    m, jnp.max(jnp.abs(cur[:, :, 1:] - cur[:, :, :W - 1])))
            pmax_ref[...] = jnp.broadcast_to(m, pmax_ref.shape)

        return kernel

    def kernel(x_ref, halo_ref, pmax_ref):
        t = pl.program_id(1)
        xv = x_ref[...].astype(jnp.float32)                              # (1, TH, W)
        halo_row = halo_ref[:, 7:8, :].astype(jnp.float32)               # input row t*TH - 1
        row = lax.broadcasted_iota(jnp.int32, (1, TH, W), 1) + t * TH
        cur = jnp.where(row < H, xv, 0.0)
        gate = (t > 0).astype(jnp.float32)                               # first tile: prev row = 0
        prev0 = halo_row * gate                                          # (1, 1, W)
        m = jnp.max(jnp.abs(cur[:, 0:1, :] - prev0))                     # first output row of tile
        m = jnp.maximum(
            m, jnp.max(jnp.abs(cur[:, 1:, :] - cur[:, :TH - 1, :])))     # remaining rows of tile
        pmax_ref[...] = jnp.broadcast_to(m, pmax_ref.shape)

    return kernel


def _make_pass2_kernel(direction: str, TH: int, H: int, W: int):
    """Recompute |grad| per tile and store |grad| * inv (inv is a scalar in SMEM)."""

    if direction == "x":

        def kernel(inv_ref, x_ref, out_ref):
            t = pl.program_id(1)
            inv = inv_ref[0]
            xv = x_ref[...].astype(jnp.float32)
            row = lax.broadcasted_iota(jnp.int32, (1, TH, W), 1) + t * TH
            cur = jnp.where(row < H, xv, 0.0)
            dt = out_ref.dtype
            out_ref[:, :, 0:1] = (jnp.abs(cur[:, :, 0:1]) * inv).astype(dt)
            if W > 1:
                out_ref[:, :, 1:W] = (
                    jnp.abs(cur[:, :, 1:] - cur[:, :, :W - 1]) * inv).astype(dt)
            out_ref[:, :, W:] = (jnp.abs(cur[:, :, W - 1:W]) * inv).astype(dt)

        return kernel

    def kernel(inv_ref, x_ref, halo_ref, out_ref):
        t = pl.program_id(1)
        inv = inv_ref[0]
        xv = x_ref[...].astype(jnp.float32)
        halo_row = halo_ref[:, 7:8, :].astype(jnp.float32)
        row = lax.broadcasted_iota(jnp.int32, (1, TH, W), 1) + t * TH
        cur = jnp.where(row < H, xv, 0.0)
        gate = (t > 0).astype(jnp.float32)
        prev0 = halo_row * gate
        dt = out_ref.dtype
        out_ref[:, 0:1, :W] = (jnp.abs(cur[:, 0:1, :] - prev0) * inv).astype(dt)
        out_ref[:, 1:TH, :W] = (
            jnp.abs(cur[:, 1:, :] - cur[:, :TH - 1, :]) * inv).astype(dt)
        out_ref[:, :, W:] = jnp.zeros((1, TH, 1), dt)                    # padded column -> 0

    return kernel


# --------------------------------------------------------------------------
# Wrapper
# --------------------------------------------------------------------------
def _choose_tile_rows(H: int, W: int, tile_rows):
    if tile_rows is None:
        # keep in+out tile buffers (double buffered) well under v5e's 16 MiB
        # default scoped-VMEM limit: ~4 MiB of f32 payload per buffer pair.
        by_vmem = max(8, (4 * 1024 * 1024) // (8 * (W + 1)))
        tile_rows = min(512, H, by_vmem)
    th = min(int(tile_rows), H)
    return max(8, (th // 8) * 8)


@functools.partial(jax.jit, static_argnames=("direction", "tile_rows"))
def gradient_pallas(input_tensor: jax.Array, direction: str, tile_rows=None) -> jax.Array:
    """Pallas equivalent of Gradient.forward.  input_tensor: (N, 1, H, W)."""
    if direction not in ("x", "y"):
        raise ValueError("Direction must be 'x' or 'y'")
    N, C, H, W = input_tensor.shape
    if C != 1:
        raise ValueError("the 2x2 smoothing kernel has a single input channel")
    if H < 8:
        # TODO(synk): support H < 8 (needs full-height output blocks).
        raise NotImplementedError("gradient_pallas requires H >= 8")

    Ho, Wo = H + 1, W + 1
    x = input_tensor.reshape(N, H, W)

    TH = _choose_tile_rows(H, W, tile_rows)
    nT = pl.cdiv(Ho, TH)       # output row tiles (grid axis 1)
    nTin = pl.cdiv(H, TH)      # input row tiles (for clamping the x block index)

    x_spec = pl.BlockSpec(
        (1, TH, W), lambda n, t: (n, jnp.minimum(t, nTin - 1), 0))
    # 8-row slab whose last row is input row t*TH - 1 (the "previous" row
    # needed at the top of each tile for the y-direction gradient).
    halo_spec = pl.BlockSpec(
        (1, 8, W), lambda n, t: (n, jnp.maximum(t * (TH // 8) - 1, 0), 0))
    smem_spec = pl.BlockSpec(memory_space=pltpu.MemorySpace.SMEM)

    parallel = pltpu.CompilerParams(
        dimension_semantics=("parallel", "parallel"))

    # ---- pass 1: global max of |grad| via per-tile partial maxima ----------
    if direction == "x":
        p1_in_specs, p1_args = [x_spec], (x,)
    else:
        p1_in_specs, p1_args = [x_spec, halo_spec], (x, x)

    partial_max = pl.pallas_call(
        _make_pass1_kernel(direction, TH, H, W),
        out_shape=jax.ShapeDtypeStruct((N, nT, 8, 128), jnp.float32),
        grid=(N, nT),
        in_specs=p1_in_specs,
        out_specs=pl.BlockSpec((1, 1, 8, 128), lambda n, t: (n, t, 0, 0)),
        compiler_params=parallel,
    )(*p1_args)

    # min|grad| == 0 exactly (zero-padded border), so only the max is needed.
    gmax = jnp.max(partial_max)
    inv = (1.0 / (gmax + 0.0001)).astype(jnp.float32).reshape((1,))

    # ---- pass 2: normalized |grad| ------------------------------------------
    if direction == "x":
        p2_in_specs, p2_args = [smem_spec, x_spec], (inv, x)
    else:
        p2_in_specs, p2_args = [smem_spec, x_spec, halo_spec], (inv, x, x)

    out = pl.pallas_call(
        _make_pass2_kernel(direction, TH, H, W),
        out_shape=jax.ShapeDtypeStruct((N, Ho, Wo), input_tensor.dtype),
        grid=(N, nT),
        in_specs=p2_in_specs,
        out_specs=pl.BlockSpec((1, TH, Wo), lambda n, t: (n, t, 0)),
        compiler_params=parallel,
    )(*p2_args)

    return out.reshape(N, 1, Ho, Wo)


# --------------------------------------------------------------------------
# Pure-JAX reference (mirrors the PyTorch module) and self-test
# --------------------------------------------------------------------------
def _gradient_reference(input_tensor: jax.Array, direction: str) -> jax.Array:
    kx = jnp.array([[0.0, 0.0], [-1.0, 1.0]], dtype=jnp.float32).reshape(1, 1, 2, 2)
    ky = jnp.transpose(kx, (0, 1, 3, 2))
    k = kx if direction == "x" else ky
    grad = lax.conv_general_dilated(
        input_tensor.astype(jnp.float32), k, window_strides=(1, 1),
        padding=((1, 1), (1, 1)), dimension_numbers=("NCHW", "OIHW", "NCHW"),
    )
    ga = jnp.abs(grad)
    gmin = jnp.min(ga)
    gmax = jnp.max(ga)
    return (ga - gmin) / (gmax - gmin + 0.0001)


if __name__ == "__main__":
    key = jax.random.PRNGKey(0)
    # NCHW with a single channel (the module's 2x2 kernel has in_channels = 1).
    x = jax.random.normal(key, (2, 1, 16, 16), dtype=jnp.float32)

    ok = True
    for direction in ("x", "y"):
        ref = _gradient_reference(x, direction)
        # default tiling and an explicit small tile (exercises halo / multi-tile path)
        for tr in (None, 8):
            out = jax.block_until_ready(gradient_pallas(x, direction, tile_rows=tr))
            if out.shape != (2, 1, 17, 17):
                ok = False
            if not jnp.allclose(out, ref, atol=1e-5, rtol=1e-5):
                ok = False

    print("KERNEL_OK" if ok else "KERNEL_MISMATCH")
</pallas_src>

<mosaic_0001>
module attributes {stable_mosaic.version = 11 : i64} {
  func.func @kernel(%arg0: i32, %arg1: i32, %arg2: memref<1xf32, #tpu.memory_space<smem>>, %arg3: memref<1x16x16xf32, #tpu.memory_space<vmem>>, %arg4: memref<1x16x17xf32, #tpu.memory_space<vmem>>) attributes {dimension_semantics = [#tpu.dimension_semantics<parallel>, #tpu.dimension_semantics<parallel>], iteration_bounds = array<i64: 2, 2>, scalar_prefetch = 0 : i64, scratch_operands = 0 : i64, tpu.core_type = #tpu.core_type<tc>, window_params = [{transform_indices = @transform_0, window_bounds = array<i64: 1>}, {transform_indices = @transform_1, window_bounds = array<i64: 1, 16, 16>}, {transform_indices = @transform_2, window_bounds = array<i64: 1, 16, 17>}]} {
    %c0 = arith.constant 0 : index
    %0 = memref.load %arg2[%c0] : memref<1xf32, #tpu.memory_space<smem>>
    %c0_0 = arith.constant 0 : index
    %c0_1 = arith.constant 0 : index
    %c0_2 = arith.constant 0 : index
    %1 = vector.load %arg3[%c0_0, %c0_1, %c0_2] : memref<1x16x16xf32, #tpu.memory_space<vmem>>, vector<1x16x16xf32>
    %2 = tpu.iota {dimensions = array<i32: 1>} : vector<1x16x16xi32>
    %c16_i32 = arith.constant 16 : i32
    %3 = arith.muli %arg1, %c16_i32 : i32
    %4 = vector.broadcast %3 : i32 to vector<1x16x16xi32>
    %5 = arith.addi %2, %4 : vector<1x16x16xi32>
    %c16_i32_3 = arith.constant 16 : i32
    %6 = vector.broadcast %c16_i32_3 : i32 to vector<1x16x16xi32>
    %7 = arith.cmpi slt, %5, %6 : vector<1x16x16xi32>
    %cst = arith.constant 0.000000e+00 : f32
    %8 = vector.broadcast %cst : f32 to vector<1x16x16xf32>
    %9 = arith.select %7, %1, %8 : vector<1x16x16xi1>, vector<1x16x16xf32>
    %10 = vector.extract_strided_slice %9 {offsets = [0, 0, 0], sizes = [1, 16, 1], strides = [1, 1, 1]} : vector<1x16x16xf32> to vector<1x16x1xf32>
    %11 = math.absf %10 : vector<1x16x1xf32>
    %12 = vector.broadcast %0 : f32 to vector<1x16x1xf32>
    %13 = arith.mulf %11, %12 : vector<1x16x1xf32>
    %c0_4 = arith.constant 0 : index
    %c0_5 = arith.constant 0 : index
    %c0_6 = arith.constant 0 : index
    %14 = vector.load %arg4[%c0_4, %c0_5, %c0_6] : memref<1x16x17xf32, #tpu.memory_space<vmem>>, vector<1x16x1xf32>
    tpu.vector_store %arg4[%c0_4, %c0_5, %c0_6], %13 {strides = array<i32>} : memref<1x16x17xf32, #tpu.memory_space<vmem>>, vector<1x16x1xf32>,
    %15 = vector.extract_strided_slice %9 {offsets = [0, 0, 1], sizes = [1, 16, 15], strides = [1, 1, 1]} : vector<1x16x16xf32> to vector<1x16x15xf32>
    %16 = vector.extract_strided_slice %9 {offsets = [0, 0, 0], sizes = [1, 16, 15], strides = [1, 1, 1]} : vector<1x16x16xf32> to vector<1x16x15xf32>
    %17 = arith.subf %15, %16 : vector<1x16x15xf32>
    %18 = math.absf %17 : vector<1x16x15xf32>
    %19 = vector.broadcast %0 : f32 to vector<1x16x15xf32>
    %20 = arith.mulf %18, %19 : vector<1x16x15xf32>
    %c0_7 = arith.constant 0 : index
    %c0_8 = arith.constant 0 : index
    %c1 = arith.constant 1 : index
    %21 = vector.load %arg4[%c0_7, %c0_8, %c1] : memref<1x16x17xf32, #tpu.memory_space<vmem>>, vector<1x16x15xf32>
    tpu.vector_store %arg4[%c0_7, %c0_8, %c1], %20 {strides = array<i32>} : memref<1x16x17xf32, #tpu.memory_space<vmem>>, vector<1x16x15xf32>,
    %22 = vector.extract_strided_slice %9 {offsets = [0, 0, 15], sizes = [1, 16, 1], strides = [1, 1, 1]} : vector<1x16x16xf32> to vector<1x16x1xf32>
    %23 = math.absf %22 : vector<1x16x1xf32>
    %24 = vector.broadcast %0 : f32 to vector<1x16x1xf32>
    %25 = arith.mulf %23, %24 : vector<1x16x1xf32>
    %c0_9 = arith.constant 0 : index
    %c0_10 = arith.constant 0 : index
    %c16 = arith.constant 16 : index
    %26 = vector.load %arg4[%c0_9, %c0_10, %c16] : memref<1x16x17xf32, #tpu.memory_space<vmem>>, vector<1x16x1xf32>
    tpu.vector_store %arg4[%c0_9, %c0_10, %c16], %25 {strides = array<i32>} : memref<1x16x17xf32, #tpu.memory_space<vmem>>, vector<1x16x1xf32>,
    return
  }
  func.func @transform_0(%arg0: i32, %arg1: i32) -> i32 {
    %c0_i32 = arith.constant 0 : i32
    %c0_i32_0 = arith.constant 0 : i32
    return %c0_i32 : i32
  }
  func.func @transform_1(%arg0: i32, %arg1: i32) -> (i32, i32, i32) {
    %c0_i32 = arith.constant 0 : i32
    %0 = arith.minsi %arg1, %c0_i32 : i32
    %c0_i32_0 = arith.constant 0 : i32
    %c0_i32_1 = arith.constant 0 : i32
    return %arg0, %0, %c0_i32_0 : i32, i32, i32
  }
  func.func @transform_2(%arg0: i32, %arg1: i32) -> (i32, i32, i32) {
    %c0_i32 = arith.constant 0 : i32
    %c0_i32_0 = arith.constant 0 : i32
    return %arg0, %arg1, %c0_i32 : i32, i32, i32
  }
}

module attributes {stable_mosaic.version = 11 : i64} {
  func.func @kernel(%arg0: i32, %arg1: i32, %arg2: memref<1x16x16xf32, #tpu.memory_space<vmem>>, %arg3: memref<1x1x8x128xf32, #tpu.memory_space<vmem>>) attributes {dimension_semantics = [#tpu.dimension_semantics<parallel>, #tpu.dimension_semantics<parallel>], iteration_bounds = array<i64: 2, 2>, scalar_prefetch = 0 : i64, scratch_operands = 0 : i64, tpu.core_type = #tpu.core_type<tc>, window_params = [{transform_indices = @transform_0, window_bounds = array<i64: 1, 16, 16>}, {transform_indices = @transform_1, window_bounds = array<i64: 1, 1, 8, 128>}]} {
    %c0 = arith.constant 0 : index
    %c0_0 = arith.constant 0 : index
    %c0_1 = arith.constant 0 : index
    %0 = vector.load %arg2[%c0, %c0_0, %c0_1] : memref<1x16x16xf32, #tpu.memory_space<vmem>>, vector<1x16x16xf32>
    %1 = tpu.iota {dimensions = array<i32: 1>} : vector<1x16x16xi32>
    %c16_i32 = arith.constant 16 : i32
    %2 = arith.muli %arg1, %c16_i32 : i32
    %3 = vector.broadcast %2 : i32 to vector<1x16x16xi32>
    %4 = arith.addi %1, %3 : vector<1x16x16xi32>
    %c16_i32_2 = arith.constant 16 : i32
    %5 = vector.broadcast %c16_i32_2 : i32 to vector<1x16x16xi32>
    %6 = arith.cmpi slt, %4, %5 : vector<1x16x16xi32>
    %cst = arith.constant 0.000000e+00 : f32
    %7 = vector.broadcast %cst : f32 to vector<1x16x16xf32>
    %8 = arith.select %6, %0, %7 : vector<1x16x16xi1>, vector<1x16x16xf32>
    %9 = vector.extract_strided_slice %8 {offsets = [0, 0, 0], sizes = [1, 16, 1], strides = [1, 1, 1]} : vector<1x16x16xf32> to vector<1x16x1xf32>
    %10 = math.absf %9 : vector<1x16x1xf32>
    %11 = vector.shape_cast %10 : vector<1x16x1xf32> to vector<1x1x16x1xf32>
    %cst_3 = arith.constant dense<0xFF800000> : vector<1xf32>
    %12 = vector.multi_reduction <maximumf>, %11, %cst_3 [1, 2, 3] : vector<1x1x16x1xf32> to vector<1xf32>
    %13 = vector.shape_cast %12 : vector<1xf32> to vector<1x1x1x1xf32>
    %14 = vector.extract %13[0, 0, 0, 0] : f32 from vector<1x1x1x1xf32>
    %15 = vector.extract_strided_slice %8 {offsets = [0, 0, 15], sizes = [1, 16, 1], strides = [1, 1, 1]} : vector<1x16x16xf32> to vector<1x16x1xf32>
    %16 = math.absf %15 : vector<1x16x1xf32>
    %17 = vector.shape_cast %16 : vector<1x16x1xf32> to vector<1x1x16x1xf32>
    %cst_4 = arith.constant dense<0xFF800000> : vector<1xf32>
    %18 = vector.multi_reduction <maximumf>, %17, %cst_4 [1, 2, 3] : vector<1x1x16x1xf32> to vector<1xf32>
    %19 = vector.shape_cast %18 : vector<1xf32> to vector<1x1x1x1xf32>
    %20 = vector.extract %19[0, 0, 0, 0] : f32 from vector<1x1x1x1xf32>
    %21 = arith.maximumf %14, %20 : f32
    %22 = vector.extract_strided_slice %8 {offsets = [0, 0, 1], sizes = [1, 16, 15], strides = [1, 1, 1]} : vector<1x16x16xf32> to vector<1x16x15xf32>
    %23 = vector.extract_strided_slice %8 {offsets = [0, 0, 0], sizes = [1, 16, 15], strides = [1, 1, 1]} : vector<1x16x16xf32> to vector<1x16x15xf32>
    %24 = arith.subf %22, %23 : vector<1x16x15xf32>
    %25 = math.absf %24 : vector<1x16x15xf32>
    %26 = vector.shape_cast %25 : vector<1x16x15xf32> to vector<1x1x16x15xf32>
    %cst_5 = arith.constant dense<0xFF800000> : vector<1xf32>
    %27 = vector.multi_reduction <maximumf>, %26, %cst_5 [1, 2, 3] : vector<1x1x16x15xf32> to vector<1xf32>
    %28 = vector.shape_cast %27 : vector<1xf32> to vector<1x1x1x1xf32>
    %29 = vector.extract %28[0, 0, 0, 0] : f32 from vector<1x1x1x1xf32>
    %30 = arith.maximumf %21, %29 : f32
    %31 = vector.broadcast %30 : f32 to vector<1x1x8x128xf32>
    %c0_6 = arith.constant 0 : index
    %c0_7 = arith.constant 0 : index
    %c0_8 = arith.constant 0 : index
    %c0_9 = arith.constant 0 : index
    %32 = vector.load %arg3[%c0_6, %c0_7, %c0_8, %c0_9] : memref<1x1x8x128xf32, #tpu.memory_space<vmem>>, vector<1x1x8x128xf32>
    tpu.vector_store %arg3[%c0_6, %c0_7, %c0_8, %c0_9], %31 {strides = array<i32>} : memref<1x1x8x128xf32, #tpu.memory_space<vmem>>, vector<1x1x8x128xf32>,
    return
  }
  func.func @transform_0(%arg0: i32, %arg1: i32) -> (i32, i32, i32) {
    %c0_i32 = arith.constant 0 : i32
    %0 = arith.minsi %arg1, %c0_i32 : i32
    %c0_i32_0 = arith.constant 0 : i32
    %c0_i32_1 = arith.constant 0 : i32
    return %arg0, %0, %c0_i32_0 : i32, i32, i32
  }
  func.func @transform_1(%arg0: i32, %arg1: i32) -> (i32, i32, i32, i32) {
    %c0_i32 = arith.constant 0 : i32
    %c0_i32_0 = arith.constant 0 : i32
    %c0_i32_1 = arith.constant 0 : i32
    return %arg0, %arg1, %c0_i32, %c0_i32_0 : i32, i32, i32, i32
  }
}

</mosaic_0001>

<llo_original>
// kernel: gradient_pallas.3
$region0: #{gradient_pallas.3}
  #allocation0 [shape = 'u32[]', space=smem, size = 0x4, offset = 0x4, fixed_abs, tag = 'smem constant byte address 0x4 - core index']
  #allocation1 [shape = 'u32[144,128]{1,0:T(1,128)}', space=vmem, size = 0x12000, scoped, tag = 'internal scratch']
  #allocation2 [shape = 'f32[1]{0:T(128)S(6)}', space=smem, size = 0x200, scoped, tag = 'scoped memory for gradient_pallas.3']
  %s0 = inlined_call_operand.<no memory space> [shape: f32[1], index: 0, kind: input, shape index: {}]
  %s1 = inlined_call_operand.vmem [shape: f32[2,16,16], index: 1, kind: input, shape index: {}]
  %s2 = inlined_call_operand.vmem [shape: f32[2,17,17], index: 2, kind: output, shape index: {}]
  %s3 = sld [smem:[#allocation0]]
  $region89: #{gradient_pallas.3} parent=0
    _
  %s5 = ssub.s32 1, %s3
  %s6 = scalar_select 0, %s5, %s3
  %7 = sst [smem:[#allocation2]] %s0
  $region1: #{gradient_pallas.3} parent=0
    #allocation3 [shape = 'u8[16384]{0}', space=vmem, size = 0x4000, scoped, tag = 'output window, operand 0']
    loop: start=0, step=1, limit=6
    $region2: #{gradient_pallas.3} parent=1 // loop_pre_header
      _
    $region3: #{gradient_pallas.3} parent=1 // loop_header
      %s9 = sphi 0, %s13
      %p10 = scmp.ge.s32.totalorder %s9, 6
      %s16 = sphi 0, %s28
      %s17 = sphi 0, %s24
      %s18 = sphi 0, %s16
      %s19 = sphi 0, %s17
      %s20 = sphi 0, %s18
      %s21 = sphi 0, %s19
      %s29 = sphi 0, %s29
      %s31 = sphi 0, %s29
      %s32 = sphi 0, %s31
      %s46 = sphi 0, %s32
      %s58 = sphi 0, %s60
      %s61 = sphi 0, %s58
      %s62 = sphi 0, %s61
      %s78 = sphi 0, %s62
      %s86 = sphi 0, %s88
      %s89 = sphi 0, %s86
      %s90 = sphi 0, %s89
      %s106 = sphi 0, %s90
    $region4: #{gradient_pallas.3} parent=1 // loop_header_branch
      %12 = sbr.rel (%p10) target = $region8
    $region5: #{gradient_pallas.3} parent=1 // loop_body
      %s14 = ssub.s32 %s9, 1
      %s15 = ssub.s32 %s9, 2
      %s22 = sadd.s32 1, %s17
      %p23 = scmp.ge.s32.totalorder %s22, 2
      %s24 = scalar_select %p23, 0, %s22
      %s25 = sadd.s32 1, %s16
      %s26 = scalar_select %p23, %s25, %s16
      %p27 = scmp.ge.s32.totalorder %s26, 2
      %s28 = scalar_select %p27, 0, %s26
      %s30 = sadd.s32 %s29, 1
      %p33 = scmp.eq.s32.totalorder %s9, 3
      %p34 = scmp.ne.s32.totalorder %s29, %s31
      %p35 = scmp.eq.s32.totalorder %s9, 0
      %p36 = por %p34, %p35
      %p37 = scmp.ne.s32.totalorder %s29, %s31
      %p38 = scmp.eq.s32.totalorder %s14, 3
      %p39 = por %p37, %p38
      %p40 = scmp.ne.s32.totalorder %s31, %s32
      %p41 = scmp.eq.s32.totalorder %s14, 0
      %p42 = por %p40, %p41
      %p43 = scmp.ne.s32.totalorder %s31, %s32
      %p44 = scmp.eq.s32.totalorder %s15, 3
      %p45 = por %p43, %p44
      %p47 = scmp.ne.s32.totalorder %s32, %s46
      %p48 = scmp.eq.s32.totalorder %s15, 0
      %p49 = por %p47, %p48
      %p50 = scmp.lt.s32.totalorder %s17, 0
      %s51 = scalar_select %p50, %s17, 0
      %p52 = scmp.lt.s32.totalorder %s24, 0
      %s53 = scalar_select %p52, %s24, 0
      %s54 = ssub.s32 %s16, %s28
      %s55 = ssub.s32 %s51, %s53
      %s56 = sor.u32 %s54, %s55
      %p57 = scmp.eq.s32.totalorder %s56, 0
      %s59 = sadd.s32 %s58, 1
      %s60 = scalar_select %p57, %s58, %s59
      %p63 = pneg %p57
      %p64 = scmp.eq.s32.totalorder %s9, 3
      %p65 = por %p63, %p64
      %p66 = scmp.ne.s32.totalorder %s58, %s61
      %p67 = scmp.eq.s32.totalorder %s9, 0
      %p68 = por %p66, %p67
      %p69 = scmp.ne.s32.totalorder %s58, %s61
      %p70 = scmp.eq.s32.totalorder %s14, 3
      %p71 = por %p69, %p70
      %p72 = scmp.ne.s32.totalorder %s61, %s62
      %p73 = scmp.eq.s32.totalorder %s14, 0
      %p74 = por %p72, %p73
      %p75 = scmp.ne.s32.totalorder %s61, %s62
      %p76 = scmp.eq.s32.totalorder %s15, 3
      %p77 = por %p75, %p76
      %p79 = scmp.ne.s32.totalorder %s62, %s78
      %p80 = scmp.eq.s32.totalorder %s15, 0
      %p81 = por %p79, %p80
      %s82 = ssub.s32 %s16, %s28
      %s83 = ssub.s32 %s17, %s24
      %s84 = sor.u32 %s82, %s83
      %p85 = scmp.eq.s32.totalorder %s84, 0
      %s87 = sadd.s32 %s86, 1
      %s88 = scalar_select %p85, %s86, %s87
      %p91 = pneg %p85
      %p92 = scmp.eq.s32.totalorder %s9, 3
      %p93 = por %p91, %p92
      %p94 = scmp.ne.s32.totalorder %s86, %s89
      %p95 = scmp.eq.s32.totalorder %s9, 0
      %p96 = por %p94, %p95
      %p97 = scmp.ne.s32.totalorder %s86, %s89
      %p98 = scmp.eq.s32.totalorder %s14, 3
      %p99 = por %p97, %p98
      %p100 = scmp.ne.s32.totalorder %s89, %s90
      %p101 = scmp.eq.s32.totalorder %s14, 0
      %p102 = por %p100, %p101
      %p103 = scmp.ne.s32.totalorder %s89, %s90
      %p104 = scmp.eq.s32.totalorder %s15, 3
      %p105 = por %p103, %p104
      %p107 = scmp.ne.s32.totalorder %s90, %s106
      %p108 = scmp.eq.s32.totalorder %s15, 0
      %p109 = por %p107, %p108
      %p110 = scmp.le.s32.totalorder 1, %s9
      %p111 = scmp.lt.s32.totalorder %s9, 5
      %p112 = pnand %p110, %p111
      %p113 = pneg %p112
      // Predicated region
      $region9: #{gradient_pallas.3} parent=5 // pred_check
        _
      $region10: #{gradient_pallas.3} parent=5 // pred_check_branch
        %115 = sbr.rel (%p112) target = $region12
      $region11: #{gradient_pallas.3} parent=5 // pred_region
        %s116 = ssub.s32 %s9, 1
        // Predicated region
        $region13: #{gradient_pallas.3} parent=11 // pred_check
          %p117 = pneg %p42
        $region14: #{gradient_pallas.3} parent=11 // pred_check_branch
          %119 = sbr.rel (%p117) target = $region16
        $region15: #{gradient_pallas.3} parent=11 // pred_region
          _
        $region16: #{gradient_pallas.3} parent=11 // pred_fallthru
          _
      $region12: #{gradient_pallas.3} parent=5 // pred_fallthru
        _
      %p120 = scmp.lt.s32.totalorder %s9, 4
      // Predicated region
      $region17: #{gradient_pallas.3} parent=5 // pred_check
        %p121 = pneg %p120
      $region18: #{gradient_pallas.3} parent=5 // pred_check_branch
        %123 = sbr.rel (%p121) target = $region20
      $region19: #{gradient_pallas.3} parent=5 // pred_region
        // Predicated region
        $region21: #{gradient_pallas.3} parent=19 // pred_check
          %p124 = pneg %p68
        $region22: #{gradient_pallas.3} parent=19 // pred_check_branch
          %126 = sbr.rel (%p124) target = $region24
        $region23: #{gradient_pallas.3} parent=19 // pred_region
          %p127 = scmp.lt.s32.totalorder %s17, 0
          %s128 = scalar_select %p127, %s17, 0
          %s129 = smul.u32 2, %s128
          %p130 = scmp.lt.s32.totalorder %s16, 1
          %s131 = scalar_select %p130, %s16, 1
          %p132 = scmp.lt.s32.totalorder %s129, 1
          %s133 = scalar_select %p132, %s129, 1
          %s134 = smul.addr %s131, 2
          %s135 = sadd.s32 %s133, %s134
          %s136 = smul.addr %s135, 8
          %s137 = scalar_lea.vmem %s1, %s136
          %p138 = scmp.lt.s32.totalorder %s17, 0
          %s139 = scalar_select %p138, %s17, 0
          %s140 = smul.u32 2, %s139
        $region24: #{gradient_pallas.3} parent=19 // pred_fallthru
          _
      $region20: #{gradient_pallas.3} parent=5 // pred_fallthru
        _
      %p141 = scmp.le.s32.totalorder 1, %s9
      %p142 = scmp.lt.s32.totalorder %s9, 5
      %p143 = pnand %p141, %p142
      %p144 = pneg %p143
      // Predicated region
      $region25: #{gradient_pallas.3} parent=5 // pred_check
        _
      $region26: #{gradient_pallas.3} parent=5 // pred_check_branch
        %146 = sbr.rel (%p143) target = $region28
      $region27: #{gradient_pallas.3} parent=5 // pred_region
        %s147 = ssub.s32 %s9, 1
        %p148 = pneg %p42
        %p149 = pneg %p39
        %p150 = scmp.lt.s32.totalorder %s19, 0
        %s151 = scalar_select %p150, %s19, 0
        %s152 = smul.u32 2, %s151
        %p153 = scmp.lt.s32.totalorder %s18, 1
        %s154 = scalar_select %p153, %s18, 1
        %p155 = scmp.lt.s32.totalorder %s152, 1
        %s156 = scalar_select %p155, %s152, 1
        %s157 = smul.addr %s154, 2
        %s158 = sadd.s32 %s156, %s157
        %s159 = smul.addr %s158, 8
        %s160 = scalar_lea.vmem %s1, %s159
        %p161 = pneg %p74
        %p162 = pneg %p71
        %p163 = pneg %p102
        %p164 = pneg %p99
        %s165 = sand.u32 %s89, 1
        %s166 = sand.u32 %s89, 1
        %s167 = smul.addr %s166, 16
        %s168 = scalar_lea.vmem [#allocation3], %s167
        %p169 = scmp.lt.s32.totalorder %s19, 0
        %s170 = scalar_select %p169, %s19, 0
        %s171 = smul.u32 2, %s170
        %p172 = scmp.lt.s32.totalorder %s18, 1
        %s173 = scalar_select %p172, %s18, 1
        %p174 = scmp.lt.s32.totalorder %s171, 1
        %s175 = scalar_select %p174, %s171, 1
        %s176 = smul.addr %s173, 2
        %s177 = sadd.s32 %s175, %s176
        %s178 = smul.addr %s177, 8
        %s179 = scalar_lea.vmem %s1, %s178
        %p180 = scmp.lt.s32.totalorder %s19, 0
        %s181 = scalar_select %p180, %s19, 0
        %s182 = smul.u32 2, %s181
        %s183 = smul.u32 2, %s19
        %s184 = ssub.s32 3, %s183
        %p185 = scmp.lt.s32.totalorder %s184, 2
        %s186 = scalar_select %p185, %s184, 2
        %s187 = smul.u32 128, %s186
        %s188 = sld [smem:[#allocation2]]
        %v189 = vld [vmem:[%s179] sm:$0xff]
        %v190 = vld [vmem:[%s179 + $0x8] sm:$0xff]
        %v191 = vlaneseq
        %v192 = vshrl.u32 %v191, 7
        %v193 = vadd.s32 %v192, 8
        %s194 = smul.u32 %s19, 16
        %v195 = vstv %s194
        %v196 = vadd.s32 %v192, %v195
        %v197 = vadd.s32 %v193, %v195
        %vm198 = vcmp.lt.s32.totalorder %v196, 16
        %vm199 = vcmp.lt.s32.totalorder %v197, 16
        %v200 = vsel %vm198, %v189, 0.0
        %v201 = vsel %vm199, %v190, 0.0
        %v202 = vand.u32 2147483647, %v200
        %v203 = vand.u32 2147483647, %v201
        %v204 = vstv %s188
        %v205 = vmul.f32 %v202, %v204
        %v206 = vmul.f32 %v203, %v204
        %vm207 = vcmask 7168
        %208 = vst.msk [vmem:[%s168] sm:$0xff] %vm207, %v205
        %209 = vst.msk [vmem:[%s168 + $0x8] sm:$0xff] %vm207, %v206
        %212 = vrot.lane.b32.xlu0 %v200, 1
        %v213 = vpop.permute.xlu0 %212
        %214 = vrot.lane.b32.xlu0 %v201, 1
        %v215 = vpop.permute.xlu0 %214
        %v218 = vsub.f32 %v200, %v213
        %v219 = vsub.f32 %v201, %v215
        %v220 = vand.u32 2147483647, %v218
        %v221 = vand.u32 2147483647, %v219
        %v222 = vmul.f32 %v220, %v204
        %v223 = vmul.f32 %v221, %v204
        %vm224 = vcmask 130056
        %225 = vst.msk [vmem:[%s168] sm:$0xff] %vm224, %v222
        %226 = vst.msk [vmem:[%s168 + $0x8] sm:$0xff] %vm224, %v223
        %229 = vrot.lane.b32.xlu0 %v205, 1
        %v230 = vpop.permute.xlu0 %229
        %231 = vrot.lane.b32.xlu0 %v206, 1
        %v232 = vpop.permute.xlu0 %231
        %vm235 = vcmask 138368
        %236 = vst.msk [vmem:[%s168] sm:$0xff] %vm235, %v230
        %237 = vst.msk [vmem:[%s168 + $0x8] sm:$0xff] %vm235, %v232
        %s238 = sand.u32 %s89, 1
        %s239 = sand.u32 %s89, 1
        %s240 = smul.addr %s239, 16
        %s241 = scalar_lea.vmem [#allocation3], %s240
        // Predicated region
        $region29: #{gradient_pallas.3} parent=27 // pred_check
          %p242 = pneg %p99
        $region30: #{gradient_pallas.3} parent=27 // pred_check_branch
          %244 = sbr.rel (%p242) target = $region32
        $region31: #{gradient_pallas.3} parent=27 // pred_region
          %s245 = smul.u32 2, %s19
          %s246 = ssub.s32 3, %s245
          %p247 = scmp.lt.s32.totalorder %s246, 2
          %s248 = scalar_select %p247, %s246, 2
          %s249 = smul.u32 128, %s248
          %p250 = scmp.ne.s32.totalorder 0, %s249
          %s251 = smul.addr %s18, 3
          %s252 = sadd.s32 %s245, %s251
          %s253 = smul.addr %s252, 8
          %s254 = scalar_lea.vmem %s2, %s253
          // Predicated region
          $region33: #{gradient_pallas.3} parent=31 // pred_check
            %p255 = pneg %p250
          $region34: #{gradient_pallas.3} parent=31 // pred_check_branch
            %257 = sbr.rel (%p255) target = $region36
          $region35: #{gradient_pallas.3} parent=31 // pred_region
            // Predicated region
            $region37: #{gradient_pallas.3} parent=35 // pred_check
              _
            $region38: #{gradient_pallas.3} parent=35 // pred_check_branch
              %259 = sbr.rel (0) target = $region40
            $region39: #{gradient_pallas.3} parent=35 // pred_region
              // Predicated region
              $region59: #{gradient_pallas.3} parent=39 // pred_check
                _
              $region60: #{gradient_pallas.3} parent=39 // pred_check_branch
                %310 = sbr.rel (0) target = $region62
              $region61: #{gradient_pallas.3} parent=39 // pred_region
                %s311 = sshrl.u32 %s248, 1
                // While loop
                $region63: #{gradient_pallas.3} parent=61 // loop_pre_header
                  _
                $region64: #{gradient_pallas.3} parent=61 // loop_header
                  %s313 = sphi 0, %s315
                  %p314 = scmp.ge.s32.totalorder %s313, %s311
                  %s318 = sphi 0, %s327
                  %s319 = sphi %s241, %s330
                  %s320 = sphi %s254, %s331
                $region65: #{gradient_pallas.3} parent=61 // loop_header_branch
                  %317 = sbr.rel (%p314) target = $region69
                $region66: #{gradient_pallas.3} parent=61 // loop_body
                  %v321 = vld [vmem:[%s319] sm:$0xff]
                  %322 = vst [vmem:[%s320] sm:$0xff] %v321
                  %v323 = vld [vmem:[%s319 + $0x8] sm:$0xff]
                  %324 = vst [vmem:[%s320 + $0x8] sm:$0xff] %v323
                  %s325 = sadd.s32 1, %s318
                  %p326 = scmp.ge.s32.totalorder %s325, %s311
                  %s327 = scalar_select %p326, 0, %s325
                  %s328 = smul.u32 %s327, 16
                  %s329 = smul.u32 %s327, 16
                  %s330 = scalar_lea.vmem %s241, %s328 [#allocation3]
                  %s331 = scalar_lea.vmem %s254, %s329
                $region67: #{gradient_pallas.3} parent=61 // loop_footer
                  %s315 = sadd.s32 %s313, 1
                $region68: #{gradient_pallas.3} parent=61 // loop_footer_branch
                  %312 = sbr.rel target = $region64
                $region69: #{gradient_pallas.3} parent=61 // loop_exit
                  _
                %s332 = sshrl.u32 %s248, 1
                %s333 = sand.u32 %s248, 1
                %s334 = smul.u32 %s332, 2
                %s335 = smul.u32 8, %s334
                %s336 = scalar_lea.vmem %s241, %s335 [#allocation3]
                %s337 = smul.u32 8, %s334
                %s338 = scalar_lea.vmem %s254, %s337
                // While loop
                $region70: #{gradient_pallas.3} parent=61 // loop_pre_header
                  _
                $region71: #{gradient_pallas.3} parent=61 // loop_header
                  %s340 = sphi 0, %s342
                  %p341 = scmp.ge.s32.totalorder %s340, %s333
                  %s345 = sphi 0, %s352
                  %s346 = sphi %s336, %s355
                  %s347 = sphi %s338, %s356
                $region72: #{gradient_pallas.3} parent=61 // loop_header_branch
                  %344 = sbr.rel (%p341) target = $region76
                $region73: #{gradient_pallas.3} parent=61 // loop_body
                  %v348 = vld [vmem:[%s346] sm:$0xff]
                  %349 = vst [vmem:[%s347] sm:$0xff] %v348
                  %s350 = sadd.s32 1, %s345
                  %p351 = scmp.ge.s32.totalorder %s350, %s333
                  %s352 = scalar_select %p351, 0, %s350
                  %s353 = smul.u32 %s352, 8
                  %s354 = smul.u32 %s352, 8
                  %s355 = scalar_lea.vmem %s336, %s353 [#allocation3]
                  %s356 = scalar_lea.vmem %s338, %s354
                $region74: #{gradient_pallas.3} parent=61 // loop_footer
                  %s342 = sadd.s32 %s340, 1
                $region75: #{gradient_pallas.3} parent=61 // loop_footer_branch
                  %339 = sbr.rel target = $region71
                $region76: #{gradient_pallas.3} parent=61 // loop_exit
                  _
              $region62: #{gradient_pallas.3} parent=39 // pred_fallthru
                _
              // Predicated region
              $region77: #{gradient_pallas.3} parent=39 // pred_check
                _
              $region78: #{gradient_pallas.3} parent=39 // pred_check_branch
                %358 = sbr.rel target = $region80
              $region79: #{gradient_pallas.3} parent=39 // pred_region
                _
              $region80: #{gradient_pallas.3} parent=39 // pred_fallthru
                _
            $region40: #{gradient_pallas.3} parent=35 // pred_fallthru
              _
            // Predicated region
            $region41: #{gradient_pallas.3} parent=35 // pred_check
              _
            $region42: #{gradient_pallas.3} parent=35 // pred_check_branch
              %261 = sbr.rel target = $region44
            $region43: #{gradient_pallas.3} parent=35 // pred_region
              %s263 = sshrl.u32 %s248, 1
              // While loop
              $region45: #{gradient_pallas.3} parent=43 // loop_pre_header
                _
              $region46: #{gradient_pallas.3} parent=43 // loop_header
                %s265 = sphi 0, %s267
                %p266 = scmp.ge.s32.totalorder %s265, %s263
                %s270 = sphi 0, %s279
                %s271 = sphi %s241, %s282
                %s272 = sphi %s254, %s283
              $region47: #{gradient_pallas.3} parent=43 // loop_header_branch
                %269 = sbr.rel (%p266) target = $region51
              $region48: #{gradient_pallas.3} parent=43 // loop_body
                %v273 = vld [vmem:[%s271] sm:$0xff]
                %274 = vst [vmem:[%s272] sm:$0xff] %v273
                %v275 = vld [vmem:[%s271 + $0x8] sm:$0xff]
                %276 = vst [vmem:[%s272 + $0x8] sm:$0xff] %v275
                %s277 = sadd.s32 1, %s270
                %p278 = scmp.ge.s32.totalorder %s277, %s263
                %s279 = scalar_select %p278, 0, %s277
                %s280 = smul.u32 %s279, 16
                %s281 = smul.u32 %s279, 16
                %s282 = scalar_lea.vmem %s241, %s280 [#allocation3]
                %s283 = scalar_lea.vmem %s254, %s281
              $region49: #{gradient_pallas.3} parent=43 // loop_footer
                %s267 = sadd.s32 %s265, 1
              $region50: #{gradient_pallas.3} parent=43 // loop_footer_branch
                %264 = sbr.rel target = $region46
              $region51: #{gradient_pallas.3} parent=43 // loop_exit
                _
              %s284 = sshrl.u32 %s248, 1
              %s285 = sand.u32 %s248, 1
              %s286 = smul.u32 %s284, 2
              %s287 = smul.u32 8, %s286
              %s288 = scalar_lea.vmem %s241, %s287 [#allocation3]
              %s289 = smul.u32 8, %s286
              %s290 = scalar_lea.vmem %s254, %s289
              // While loop
              $region52: #{gradient_pallas.3} parent=43 // loop_pre_header
                _
              $region53: #{gradient_pallas.3} parent=43 // loop_header
                %s292 = sphi 0, %s294
                %p293 = scmp.ge.s32.totalorder %s292, %s285
                %s297 = sphi 0, %s304
                %s298 = sphi %s288, %s307
                %s299 = sphi %s290, %s308
              $region54: #{gradient_pallas.3} parent=43 // loop_header_branch
                %296 = sbr.rel (%p293) target = $region58
              $region55: #{gradient_pallas.3} parent=43 // loop_body
                %v300 = vld [vmem:[%s298] sm:$0xff]
                %301 = vst [vmem:[%s299] sm:$0xff] %v300
                %s302 = sadd.s32 1, %s297
                %p303 = scmp.ge.s32.totalorder %s302, %s285
                %s304 = scalar_select %p303, 0, %s302
                %s305 = smul.u32 %s304, 8
                %s306 = smul.u32 %s304, 8
                %s307 = scalar_lea.vmem %s288, %s305 [#allocation3]
                %s308 = scalar_lea.vmem %s290, %s306
              $region56: #{gradient_pallas.3} parent=43 // loop_footer
                %s294 = sadd.s32 %s292, 1
              $region57: #{gradient_pallas.3} parent=43 // loop_footer_branch
                %291 = sbr.rel target = $region53
              $region58: #{gradient_pallas.3} parent=43 // loop_exit
                _
            $region44: #{gradient_pallas.3} parent=35 // pred_fallthru
              _
          $region36: #{gradient_pallas.3} parent=31 // pred_fallthru
            _
          %359 = vnop
        $region32: #{gradient_pallas.3} parent=27 // pred_fallthru
          _
      $region28: #{gradient_pallas.3} parent=5 // pred_fallthru
        _
      %p360 = scmp.le.s32.totalorder 2, %s9
      // Predicated region
      $region81: #{gradient_pallas.3} parent=5 // pred_check
        %p361 = pneg %p360
      $region82: #{gradient_pallas.3} parent=5 // pred_check_branch
        %363 = sbr.rel (%p361) target = $region84
      $region83: #{gradient_pallas.3} parent=5 // pred_region
        %s364 = ssub.s32 %s9, 2
        // Predicated region
        $region85: #{gradient_pallas.3} parent=83 // pred_check
          %p365 = pneg %p105
        $region86: #{gradient_pallas.3} parent=83 // pred_check_branch
          %367 = sbr.rel (%p365) target = $region88
        $region87: #{gradient_pallas.3} parent=83 // pred_region
          %s368 = sand.u32 %s90, 1
          %s369 = sand.u32 %s90, 1
          %s370 = smul.addr %s369, 16
          %s371 = scalar_lea.vmem [#allocation3], %s370
        $region88: #{gradient_pallas.3} parent=83 // pred_fallthru
          _
      $region84: #{gradient_pallas.3} parent=5 // pred_fallthru
        _
    $region6: #{gradient_pallas.3} parent=1 // loop_footer
      %s13 = sadd.s32 1, %s9
    $region7: #{gradient_pallas.3} parent=1 // loop_footer_branch
      %8 = sbr.rel target = $region3
    $region8: #{gradient_pallas.3} parent=1 // loop_exit
      _

// kernel: gradient_pallas.2
$region0: #{gradient_pallas.2}
  #allocation0 [shape = 'u32[]', space=smem, size = 0x4, offset = 0x4, fixed_abs, tag = 'smem constant byte address 0x4 - core index']
  #allocation1 [shape = 'u32[144,128]{1,0:T(1,128)}', space=vmem, size = 0x12000, scoped, tag = 'internal scratch']
  %s0 = inlined_call_operand.hbm [shape: f32[2,16,16], index: 0, kind: input, shape index: {}]
  %s1 = inlined_call_operand.vmem [shape: f32[2,2,8,128], index: 1, kind: output, shape index: {}]
  %s2 = sld [smem:[#allocation0]]
  $region41: #{gradient_pallas.2} parent=0
    _
  %s4 = ssub.s32 1, %s2
  %s5 = scalar_select 0, %s4, %s2
  $region1: #{gradient_pallas.2} parent=0
    #allocation2 [shape = 'u8[16384]{0}', space=vmem, size = 0x4000, scoped, tag = 'input window, operand 0']
    #allocation3 [shape = 's32[2]{0}', space=sflag, size = 0x8, scoped, tag = 'scoped memory for gradient_pallas.2']
    %6 = vsyncpa [#allocation3], 0
    %s7 = scalar_lea.sflag [#allocation3], 1
    %8 = vsyncpa %s7, 0
    loop: start=0, step=1, limit=6
    $region2: #{gradient_pallas.2} parent=1 // loop_pre_header
      _
    $region3: #{gradient_pallas.2} parent=1 // loop_header
      %s10 = sphi 0, %s14
      %p11 = scmp.ge.s32.totalorder %s10, 6
      %s17 = sphi 0, %s29
      %s18 = sphi 0, %s25
      %s19 = sphi 0, %s17
      %s20 = sphi 0, %s18
      %s21 = sphi 0, %s19
      %s22 = sphi 0, %s20
      %s38 = sphi 0, %s40
      %s41 = sphi 0, %s38
      %s42 = sphi 0, %s41
      %s58 = sphi 0, %s42
      %s66 = sphi 0, %s68
      %s69 = sphi 0, %s66
      %s70 = sphi 0, %s69
      %s86 = sphi 0, %s70
    $region4: #{gradient_pallas.2} parent=1 // loop_header_branch
      %13 = sbr.rel (%p11) target = $region8
    $region5: #{gradient_pallas.2} parent=1 // loop_body
      %s15 = ssub.s32 %s10, 1
      %s16 = ssub.s32 %s10, 2
      %s23 = sadd.s32 1, %s18
      %p24 = scmp.ge.s32.totalorder %s23, 2
      %s25 = scalar_select %p24, 0, %s23
      %s26 = sadd.s32 1, %s17
      %s27 = scalar_select %p24, %s26, %s17
      %p28 = scmp.ge.s32.totalorder %s27, 2
      %s29 = scalar_select %p28, 0, %s27
      %p30 = scmp.lt.s32.totalorder %s18, 0
      %s31 = scalar_select %p30, %s18, 0
      %p32 = scmp.lt.s32.totalorder %s25, 0
      %s33 = scalar_select %p32, %s25, 0
      %s34 = ssub.s32 %s17, %s29
      %s35 = ssub.s32 %s31, %s33
      %s36 = sor.u32 %s34, %s35
      %p37 = scmp.eq.s32.totalorder %s36, 0
      %s39 = sadd.s32 %s38, 1
      %s40 = scalar_select %p37, %s38, %s39
      %p43 = pneg %p37
      %p44 = scmp.eq.s32.totalorder %s10, 3
      %p45 = por %p43, %p44
      %p46 = scmp.ne.s32.totalorder %s38, %s41
      %p47 = scmp.eq.s32.totalorder %s10, 0
      %p48 = por %p46, %p47
      %p49 = scmp.ne.s32.totalorder %s38, %s41
      %p50 = scmp.eq.s32.totalorder %s15, 3
      %p51 = por %p49, %p50
      %p52 = scmp.ne.s32.totalorder %s41, %s42
      %p53 = scmp.eq.s32.totalorder %s15, 0
      %p54 = por %p52, %p53
      %p55 = scmp.ne.s32.totalorder %s41, %s42
      %p56 = scmp.eq.s32.totalorder %s16, 3
      %p57 = por %p55, %p56
      %p59 = scmp.ne.s32.totalorder %s42, %s58
      %p60 = scmp.eq.s32.totalorder %s16, 0
      %p61 = por %p59, %p60
      %s62 = ssub.s32 %s17, %s29
      %s63 = ssub.s32 %s18, %s25
      %s64 = sor.u32 %s62, %s63
      %p65 = scmp.eq.s32.totalorder %s64, 0
      %s67 = sadd.s32 %s66, 1
      %s68 = scalar_select %p65, %s66, %s67
      %p71 = pneg %p65
      %p72 = scmp.eq.s32.totalorder %s10, 3
      %p73 = por %p71, %p72
      %p74 = scmp.ne.s32.totalorder %s66, %s69
      %p75 = scmp.eq.s32.totalorder %s10, 0
      %p76 = por %p74, %p75
      %p77 = scmp.ne.s32.totalorder %s66, %s69
      %p78 = scmp.eq.s32.totalorder %s15, 3
      %p79 = por %p77, %p78
      %p80 = scmp.ne.s32.totalorder %s69, %s70
      %p81 = scmp.eq.s32.totalorder %s15, 0
      %p82 = por %p80, %p81
      %p83 = scmp.ne.s32.totalorder %s69, %s70
      %p84 = scmp.eq.s32.totalorder %s16, 3
      %p85 = por %p83, %p84
      %p87 = scmp.ne.s32.totalorder %s70, %s86
      %p88 = scmp.eq.s32.totalorder %s16, 0
      %p89 = por %p87, %p88
      %p90 = scmp.le.s32.totalorder 1, %s10
      %p91 = scmp.lt.s32.totalorder %s10, 5
      %p92 = pnand %p90, %p91
      %p93 = pneg %p92
      // Predicated region
      $region9: #{gradient_pallas.2} parent=5 // pred_check
        _
      $region10: #{gradient_pallas.2} parent=5 // pred_check_branch
        %95 = sbr.rel (%p92) target = $region12
      $region11: #{gradient_pallas.2} parent=5 // pred_region
        %s96 = ssub.s32 %s10, 1
      $region12: #{gradient_pallas.2} parent=5 // pred_fallthru
        _
      %p97 = scmp.lt.s32.totalorder %s10, 4
      // Predicated region
      $region13: #{gradient_pallas.2} parent=5 // pred_check
        %p98 = pneg %p97
      $region14: #{gradient_pallas.2} parent=5 // pred_check_branch
        %100 = sbr.rel (%p98) target = $region16
      $region15: #{gradient_pallas.2} parent=5 // pred_region
        // Predicated region
        $region17: #{gradient_pallas.2} parent=15 // pred_check
          %p101 = pneg %p48
        $region18: #{gradient_pallas.2} parent=15 // pred_check_branch
          %103 = sbr.rel (%p101) target = $region20
        $region19: #{gradient_pallas.2} parent=15 // pred_region
          %s104 = sand.u32 %s38, 1
          %s105 = scalar_lea.sflag [#allocation3], %s104
          %s106 = sand.u32 %s38, 1
          %s107 = smul.addr %s106, 16
          %s108 = scalar_lea.vmem [#allocation2], %s107
          %p109 = scmp.lt.s32.totalorder %s18, 0
          %s110 = scalar_select %p109, %s18, 0
          %s111 = smul.u32 2, %s110
          %s113 = ssub.s32 256, 256
          %114 = vsyncadd %s105, %s113
          %s115 = smul.addr %s17, 2
          %s116 = sadd.s32 %s111, %s115
          %s117 = smul.addr %s116, 128
          %s118 = scalar_lea.hbm %s0, %s117
          %s119 = sshll.u32 %s108, 4
          %s120 = int_to_ptr.vmem [resolvable:$true] %s119
          %125 = dma.hbm_to_vmem [thread:$0]  %s118, 256, %s120, %s105, 128, 128, 8
        $region20: #{gradient_pallas.2} parent=15 // pred_fallthru
          _
      $region16: #{gradient_pallas.2} parent=5 // pred_fallthru
        _
      %p126 = scmp.le.s32.totalorder 1, %s10
      %p127 = scmp.lt.s32.totalorder %s10, 5
      %p128 = pnand %p126, %p127
      %p129 = pneg %p128
      // Predicated region
      $region21: #{gradient_pallas.2} parent=5 // pred_check
        _
      $region22: #{gradient_pallas.2} parent=5 // pred_check_branch
        %131 = sbr.rel (%p128) target = $region24
      $region23: #{gradient_pallas.2} parent=5 // pred_region
        %s132 = ssub.s32 %s10, 1
        %s133 = sand.u32 %s41, 1
        %s134 = scalar_lea.sflag [#allocation3], %s133
        %s135 = sand.u32 %s41, 1
        %s136 = smul.addr %s135, 16
        %s137 = scalar_lea.vmem [#allocation2], %s136
        // Predicated region
        $region25: #{gradient_pallas.2} parent=23 // pred_check
          %p138 = pneg %p54
        $region26: #{gradient_pallas.2} parent=23 // pred_check_branch
          %140 = sbr.rel (%p138) target = $region28
        $region27: #{gradient_pallas.2} parent=23 // pred_region
          %141 = dma.done %s134, 256
        $region28: #{gradient_pallas.2} parent=23 // pred_fallthru
          _
        %s142 = sand.u32 %s41, 1
        %s143 = scalar_lea.sflag [#allocation3], %s142
        %s144 = sand.u32 %s41, 1
        %s145 = smul.addr %s144, 16
        %s146 = scalar_lea.vmem [#allocation2], %s145
        %p147 = pneg %p54
        %p148 = pneg %p51
        %p149 = pneg %p82
        %p150 = pneg %p79
        %p151 = scmp.lt.s32.totalorder %s19, 1
        %s152 = scalar_select %p151, %s19, 1
        %p153 = scmp.lt.s32.totalorder %s20, 1
        %s154 = scalar_select %p153, %s20, 1
        %s155 = smul.addr %s152, 2
        %s156 = sadd.s32 %s154, %s155
        %s157 = smul.addr %s156, 8
        %s158 = scalar_lea.vmem %s1, %s157
        %p159 = scmp.lt.s32.totalorder %s20, 0
        %s160 = scalar_select %p159, %s20, 0
        %s161 = smul.u32 2, %s160
        %p162 = scmp.lt.s32.totalorder %s19, 1
        %s163 = scalar_select %p162, %s19, 1
        %p164 = scmp.lt.s32.totalorder %s20, 1
        %s165 = scalar_select %p164, %s20, 1
        %s166 = smul.addr %s163, 2
        %s167 = sadd.s32 %s165, %s166
        %s168 = smul.addr %s167, 8
        %s169 = scalar_lea.vmem %s1, %s168
        %v170 = vld [vmem:[%s137] sm:$0xff]
        %v171 = vld [vmem:[%s137 + $0x8] sm:$0xff]
        %v172 = vlaneseq
        %v173 = vshrl.u32 %v172, 7
        %v174 = vadd.s32 %v173, 8
        %s175 = smul.u32 %s20, 16
        %v176 = vstv %s175
        %v177 = vadd.s32 %v173, %v176
        %v178 = vadd.s32 %v174, %v176
        %vm179 = vcmp.lt.s32.totalorder %v177, 16
        %vm180 = vcmp.lt.s32.totalorder %v178, 16
        %v181 = vsel %vm179, %v170, 0.0
        %v182 = vsel %vm180, %v171, 0.0
        %v183 = vand.u32 2147483647, %v181
        %v184 = vand.u32 2147483647, %v182
        %vm185 = vcmask 7168
        %v186 = vsel %vm185, %v183, -inf
        %v187 = vsel %vm185, %v184, -inf
        %v188 = vmax.f32 %v186, %v187
        %189 = vmax.xlane.f32.xlu0 %v188
        %v190 = vpop.xlane.xlu0 %189
        %v191 = vrot.slane %v190, 4
        %v192 = vmax.f32 %v190, %v191
        %v193 = vrot.slane %v192, 2
        %v194 = vmax.f32 %v192, %v193
        %v195 = vrot.slane %v194, 1
        %v196 = vmax.f32 %v194, %v195
        %s197 = vtos %v196
        %vm198 = vcmask 130168
        %v199 = vsel %vm198, %v183, -inf
        %v200 = vsel %vm198, %v184, -inf
        %v201 = vmax.f32 %v199, %v200
        %202 = vmax.xlane.f32.xlu0 %v201
        %v203 = vpop.xlane.xlu0 %202
        %v204 = vrot.slane %v203, 4
        %v205 = vmax.f32 %v203, %v204
        %v206 = vrot.slane %v205, 2
        %v207 = vmax.f32 %v205, %v206
        %v208 = vrot.slane %v207, 1
        %v209 = vmax.f32 %v207, %v208
        %s210 = vtos %v209
        %s211 = smax.f32 %s197, %s210
        %214 = vrot.lane.b32.xlu0 %v181, 1
        %v215 = vpop.permute.xlu0 %214
        %216 = vrot.lane.b32.xlu0 %v182, 1
        %v217 = vpop.permute.xlu0 %216
        %v220 = vsub.f32 %v181, %v215
        %v221 = vsub.f32 %v182, %v217
        %v222 = vand.u32 2147483647, %v220
        %v223 = vand.u32 2147483647, %v221
        %vm224 = vcmask 130056
        %v225 = vsel %vm224, %v222, -inf
        %v226 = vsel %vm224, %v223, -inf
        %v227 = vmax.f32 %v225, %v226
        %228 = vmax.xlane.f32.xlu0 %v227
        %v229 = vpop.xlane.xlu0 %228
        %v230 = vrot.slane %v229, 4
        %v231 = vmax.f32 %v229, %v230
        %v232 = vrot.slane %v231, 2
        %v233 = vmax.f32 %v231, %v232
        %v234 = vrot.slane %v233, 1
        %v235 = vmax.f32 %v233, %v234
        %s236 = vtos %v235
        %s237 = smax.f32 %s211, %s236
        %v238 = vstv %s237
        %239 = vst [vmem:[%s169] sm:$0xff] %v238
        %p240 = scmp.lt.s32.totalorder %s19, 1
        %s241 = scalar_select %p240, %s19, 1
        %p242 = scmp.lt.s32.totalorder %s20, 1
        %s243 = scalar_select %p242, %s20, 1
        %s244 = smul.addr %s241, 2
        %s245 = sadd.s32 %s243, %s244
        %s246 = smul.addr %s245, 8
        %s247 = scalar_lea.vmem %s1, %s246
        // Predicated region
        $region29: #{gradient_pallas.2} parent=23 // pred_check
          %p248 = pneg %p79
        $region30: #{gradient_pallas.2} parent=23 // pred_check_branch
          %250 = sbr.rel (%p248) target = $region32
        $region31: #{gradient_pallas.2} parent=23 // pred_region
          _
        $region32: #{gradient_pallas.2} parent=23 // pred_fallthru
          _
      $region24: #{gradient_pallas.2} parent=5 // pred_fallthru
        _
      %p251 = scmp.le.s32.totalorder 2, %s10
      // Predicated region
      $region33: #{gradient_pallas.2} parent=5 // pred_check
        %p252 = pneg %p251
      $region34: #{gradient_pallas.2} parent=5 // pred_check_branch
        %254 = sbr.rel (%p252) target = $region36
      $region35: #{gradient_pallas.2} parent=5 // pred_region
        %s255 = ssub.s32 %s10, 2
        // Predicated region
        $region37: #{gradient_pallas.2} parent=35 // pred_check
          %p256 = pneg %p85
        $region38: #{gradient_pallas.2} parent=35 // pred_check_branch
          %258 = sbr.rel (%p256) target = $region40
        $region39: #{gradient_pallas.2} parent=35 // pred_region
          %p259 = scmp.lt.s32.totalorder %s21, 1
          %s260 = scalar_select %p259, %s21, 1
          %p261 = scmp.lt.s32.totalorder %s22, 1
          %s262 = scalar_select %p261, %s22, 1
          %s263 = smul.addr %s260, 2
          %s264 = sadd.s32 %s262, %s263
          %s265 = smul.addr %s264, 8
          %s266 = scalar_lea.vmem %s1, %s265
        $region40: #{gradient_pallas.2} parent=35 // pred_fallthru
          _
      $region36: #{gradient_pallas.2} parent=5 // pred_fallthru
        _
    $region6: #{gradient_pallas.2} parent=1 // loop_footer
      %s14 = sadd.s32 1, %s10
    $region7: #{gradient_pallas.2} parent=1 // loop_footer_branch
      %9 = sbr.rel target = $region3
    $region8: #{gradient_pallas.2} parent=1 // loop_exit
      _
    %267 = vsyncpa [#allocation3], 1
    %s268 = scalar_lea.sflag [#allocation3], 1
    %269 = vsyncpa %s268, 1

</llo_original>
